<compile_context>
chip_gen: v5e
topology: v5e:2x2
jax: 0.10.0
libtpu: 0.0.40
codegen_flags: <defaults>
</compile_context>

<pallas_src>
import jax
import jax.numpy as jnp
from jax.experimental import pallas as pl
from jax.experimental.pallas import tpu as pltpu

IN_FEATURES = 2
OUT_FEATURES = 1

LANE = 128            # batch lanes per slab row
SUBLANE = 8           # sublane granularity for (8,128) tiling
MAX_TILE_ROWS = 4096  # rows per grid step: 4 MiB of x + 2 MiB of y per step


def _linear_kernel(wb_ref, x_ref, o_ref):
    """y = w0*x0 + w1*x1 + b on dense (rows, 128) slabs (VPU FMA only).

    wb_ref: SMEM (3,) f32          = [w0, w1, bias]
    x_ref : VMEM (2, TR, 128) f32  ; x_ref[f][r, l] = x[row_base*128 + r*128 + l, f]
    o_ref : VMEM (TR, 128) f32     ; lane/sublane-dense output slab
    """
    o_ref[...] = wb_ref[0] * x_ref[0] + wb_ref[1] * x_ref[1] + wb_ref[2]


def _round_up(v, m):
    return (v + m - 1) // m * m


@jax.jit
def linear_pallas(x, weight, bias):
    """x: (B, 2); weight: (1, 2) (PyTorch layout); bias: (1,). Returns (B, 1)."""
    B, f_in = x.shape
    f_out = weight.shape[0]
    assert f_in == IN_FEATURES and f_out == OUT_FEATURES

    # --- tiling: batch -> dense (rows, 128) slab, nearly-balanced row tiles ---
    rows = pl.cdiv(B, LANE)                                # pad batch to 128 lanes
    grid = pl.cdiv(rows, MAX_TILE_ROWS)
    tile_rows = _round_up(pl.cdiv(rows, grid), SUBLANE)    # multiple of 8 sublanes
    rows_pad = tile_rows * grid                            # minimal over-pad (< grid*8 rows)
    b_pad = rows_pad * LANE

    # --- layout plumbing (fused by XLA under jit): (B,2) -> (2, rows_pad, 128) ---
    xf = x.astype(jnp.float32)
    x_pad = jnp.pad(xf, ((0, b_pad - B), (0, 0)))
    x_slab = x_pad.T.reshape(IN_FEATURES, rows_pad, LANE)

    # 12 bytes of parameters -> one SMEM scalar array [w0, w1, b].
    wb = jnp.concatenate([weight.astype(jnp.float32).reshape(-1),
                          bias.astype(jnp.float32).reshape(-1)])

    # Note: on v7x, dimension_semantics=(pltpu.CORE_PARALLEL,) would shard the
    # batch axis across both TensorCores; kept as "parallel" here so the kernel
    # compiles unchanged on single-TC v5e/v6e.
    out = pl.pallas_call(
        _linear_kernel,
        out_shape=jax.ShapeDtypeStruct((rows_pad, LANE), jnp.float32),
        grid=(grid,),
        in_specs=[
            pl.BlockSpec(memory_space=pltpu.MemorySpace.SMEM),            # [w0, w1, b]
            pl.BlockSpec((IN_FEATURES, tile_rows, LANE), lambda i: (0, i, 0)),
        ],
        out_specs=pl.BlockSpec((tile_rows, LANE), lambda i: (i, 0)),
        compiler_params=pltpu.CompilerParams(
            dimension_semantics=("parallel",),
            vmem_limit_bytes=32 * 1024 * 1024,
        ),
    )(wb, x_slab)

    # Slab -> (B, 1); padded lanes (value = bias) are sliced off. Fuses under jit.
    return out.reshape(-1)[:B].reshape(B, OUT_FEATURES)


if __name__ == "__main__":
    key = jax.random.PRNGKey(0)
    k_x, k_w, k_b = jax.random.split(key, 3)

    # Deterministic parameter init (mimics nn.Linear's uniform(-1/sqrt(fan_in), ...)).
    bound = 1.0 / jnp.sqrt(jnp.float32(IN_FEATURES))
    weight = jax.random.uniform(
        k_w, (OUT_FEATURES, IN_FEATURES), minval=-bound, maxval=bound,
        dtype=jnp.float32)
    bias = jax.random.uniform(
        k_b, (OUT_FEATURES,), minval=-bound, maxval=bound, dtype=jnp.float32)

    ok = True
    for batch in (8, 333):   # small shapes; 333 exercises the lane/row padding path
        kx = jax.random.fold_in(k_x, batch)
        x = jax.random.normal(kx, (batch, IN_FEATURES), dtype=jnp.float32)

        y = linear_pallas(x, weight, bias)
        y = jax.block_until_ready(y)

        y_ref = x @ weight.T + bias
        ok &= (y.shape == (batch, OUT_FEATURES))
        ok &= bool(jnp.allclose(y, y_ref, atol=1e-5, rtol=1e-5))

    assert ok
    print("KERNEL_OK")
</pallas_src>

<mosaic_0001>
module attributes {stable_mosaic.version = 11 : i64} {
  func.func @_linear_kernel(%arg0: i32, %arg1: memref<3xf32, #tpu.memory_space<smem>>, %arg2: memref<2x8x128xf32, #tpu.memory_space<vmem>>, %arg3: memref<8x128xf32, #tpu.memory_space<vmem>>) attributes {dimension_semantics = [#tpu.dimension_semantics<parallel>], iteration_bounds = array<i64: 1>, scalar_prefetch = 0 : i64, scratch_operands = 0 : i64, tpu.core_type = #tpu.core_type<tc>, window_params = [{transform_indices = @transform_0, window_bounds = array<i64: 3>}, {transform_indices = @transform_1, window_bounds = array<i64: 2, 8, 128>}, {transform_indices = @transform_2, window_bounds = array<i64: 8, 128>}]} {
    %c0 = arith.constant 0 : index
    %0 = memref.load %arg1[%c0] : memref<3xf32, #tpu.memory_space<smem>>
    %c0_0 = arith.constant 0 : index
    %c0_1 = arith.constant 0 : index
    %c0_2 = arith.constant 0 : index
    %1 = vector.load %arg2[%c0_0, %c0_1, %c0_2] : memref<2x8x128xf32, #tpu.memory_space<vmem>>, vector<1x8x128xf32>
    %2 = vector.shape_cast %1 : vector<1x8x128xf32> to vector<8x128xf32>
    %3 = vector.broadcast %0 : f32 to vector<8x128xf32>
    %4 = arith.mulf %3, %2 : vector<8x128xf32>
    %c1 = arith.constant 1 : index
    %5 = memref.load %arg1[%c1] : memref<3xf32, #tpu.memory_space<smem>>
    %c1_3 = arith.constant 1 : index
    %c0_4 = arith.constant 0 : index
    %c0_5 = arith.constant 0 : index
    %6 = vector.load %arg2[%c1_3, %c0_4, %c0_5] : memref<2x8x128xf32, #tpu.memory_space<vmem>>, vector<1x8x128xf32>
    %7 = vector.shape_cast %6 : vector<1x8x128xf32> to vector<8x128xf32>
    %8 = vector.broadcast %5 : f32 to vector<8x128xf32>
    %9 = arith.mulf %8, %7 : vector<8x128xf32>
    %10 = arith.addf %4, %9 : vector<8x128xf32>
    %c2 = arith.constant 2 : index
    %11 = memref.load %arg1[%c2] : memref<3xf32, #tpu.memory_space<smem>>
    %12 = vector.broadcast %11 : f32 to vector<8x128xf32>
    %13 = arith.addf %10, %12 : vector<8x128xf32>
    %c0_6 = arith.constant 0 : index
    %c0_7 = arith.constant 0 : index
    %14 = vector.load %arg3[%c0_6, %c0_7] : memref<8x128xf32, #tpu.memory_space<vmem>>, vector<8x128xf32>
    tpu.vector_store %arg3[%c0_6, %c0_7], %13 {strides = array<i32>} : memref<8x128xf32, #tpu.memory_space<vmem>>, vector<8x128xf32>,
    return
  }
  func.func @transform_0(%arg0: i32) -> i32 {
    %c0_i32 = arith.constant 0 : i32
    %c0_i32_0 = arith.constant 0 : i32
    return %c0_i32 : i32
  }
  func.func @transform_1(%arg0: i32) -> (i32, i32, i32) {
    %c0_i32 = arith.constant 0 : i32
    %c0_i32_0 = arith.constant 0 : i32
    %c0_i32_1 = arith.constant 0 : i32
    return %c0_i32, %arg0, %c0_i32_0 : i32, i32, i32
  }
  func.func @transform_2(%arg0: i32) -> (i32, i32) {
    %c0_i32 = arith.constant 0 : i32
    %c0_i32_0 = arith.constant 0 : i32
    return %arg0, %c0_i32 : i32, i32
  }
}

</mosaic_0001>

<llo_original>
// kernel: linear_pallas.1
$region0: #{linear_pallas.1}
  #allocation0 [shape = 'u32[]', space=smem, size = 0x4, offset = 0x4, fixed_abs, tag = 'smem constant byte address 0x4 - core index']
  #allocation1 [shape = 'u32[72,128]{1,0:T(1,128)}', space=vmem, size = 0x9000, scoped, tag = 'internal scratch']
  %s0 = inlined_call_operand.vmem [shape: f32[3], index: 0, kind: input, shape index: {}]
  %s1 = inlined_call_operand.vmem [shape: f32[2,8,128], index: 1, kind: input, shape index: {}]
  %s2 = inlined_call_operand.vmem [shape: f32[8,128], index: 2, kind: output, shape index: {}]
  %s3 = sld [smem:[#allocation0]]
  $region22: #{linear_pallas.1} parent=0
    _
  %s5 = ssub.s32 1, %s3
  %s6 = scalar_select 0, %s5, %s3
  $region1: #{linear_pallas.1} parent=0
    #allocation2 [shape = 'u8[512]{0}', space=smem, size = 0x200, scoped, tag = 'input window, operand 0, single buffered']
    #allocation3 [shape = 's32[1]{0}', space=sflag, size = 0x4, scoped, tag = 'scoped memory for linear_pallas.1']
    %7 = vsyncpa [#allocation3], 0
    // Predicated region
    $region2: #{linear_pallas.1} parent=1 // pred_check
      _
    $region3: #{linear_pallas.1} parent=1 // pred_check_branch
      %9 = sbr.rel (0) target = $region5
    $region4: #{linear_pallas.1} parent=1 // pred_region
      %11 = vsyncadd [#allocation3], 0
      %s13 = sshll.u32 %s0, 4
      %s14 = int_to_ptr.vmem [resolvable:$true] %s13
      %16 = dma.vmem_to_smem %s14, 16, [#allocation2], [#allocation3]
    $region5: #{linear_pallas.1} parent=1 // pred_fallthru
      _
    // Predicated region
    $region6: #{linear_pallas.1} parent=1 // pred_check
      _
    $region7: #{linear_pallas.1} parent=1 // pred_check_branch
      %18 = sbr.rel (0) target = $region9
    $region8: #{linear_pallas.1} parent=1 // pred_region
      _
    $region9: #{linear_pallas.1} parent=1 // pred_fallthru
      _
    // Predicated region
    $region10: #{linear_pallas.1} parent=1 // pred_check
      _
    $region11: #{linear_pallas.1} parent=1 // pred_check_branch
      %20 = sbr.rel (0) target = $region13
    $region12: #{linear_pallas.1} parent=1 // pred_region
      %22 = dma.done [#allocation3], 16
    $region13: #{linear_pallas.1} parent=1 // pred_fallthru
      _
    %23 = sfence
    %s24 = sld [smem:[#allocation2]]
    %v25 = vld [vmem:[%s1] sm:$0xff]
    %v26 = vstv %s24
    %v27 = vmul.f32 %v26, %v25
    %s28 = sld [smem:[#allocation2 + $0x1]]
    %s29 = scalar_lea.vmem %s1, 8
    %v30 = vld [vmem:[%s29] sm:$0xff]
    %v31 = vstv %s28
    %v32 = vmul.f32 %v31, %v30
    %v33 = vadd.f32 %v27, %v32
    %s34 = sld [smem:[#allocation2 + $0x2]]
    %v35 = vstv %s34
    %v36 = vadd.f32 %v33, %v35
    %37 = vst [vmem:[%s2] sm:$0xff] %v36
    // Predicated region
    $region14: #{linear_pallas.1} parent=1 // pred_check
      _
    $region15: #{linear_pallas.1} parent=1 // pred_check_branch
      %39 = sbr.rel (0) target = $region17
    $region16: #{linear_pallas.1} parent=1 // pred_region
      _
    $region17: #{linear_pallas.1} parent=1 // pred_fallthru
      _
    // Predicated region
    $region18: #{linear_pallas.1} parent=1 // pred_check
      _
    $region19: #{linear_pallas.1} parent=1 // pred_check_branch
      %41 = sbr.rel (0) target = $region21
    $region20: #{linear_pallas.1} parent=1 // pred_region
      _
    $region21: #{linear_pallas.1} parent=1 // pred_fallthru
      _
    %42 = vsyncpa [#allocation3], 1

</llo_original>
